<compile_context>
chip_gen: v5e
topology: v5e:2x2
jax: 0.10.0
libtpu: 0.0.40
codegen_flags: <defaults>
</compile_context>

<pallas_src>
import math
import functools

import jax
import jax.numpy as jnp
from jax import lax
from jax.experimental import pallas as pl
from jax.experimental.pallas import tpu as pltpu

F16_MIN = float(jnp.finfo(jnp.float16).min)  # torch.finfo(torch.float16).min == -65504.0


def _mha_kernel(num_heads, head_dim,
                x_ref, mask_ref, wqkv_ref, bqkv_ref, wfc_ref, bfc_ref,
                o_ref, ctx_ref):
    """One batch element per grid step.

    x_ref    (1, S, D)  f32     input activations
    mask_ref (1, S, S)  bf16    additive mask (0 keep / -65504 drop)
    wqkv_ref (D, 3D)    bf16    fused [Wq*scale | Wk | Wv]
    bqkv_ref (1, 3D)    f32     fused [bq*scale | bk | bv]
    wfc_ref  (D, D)     bf16    output projection weight
    bfc_ref  (1, D)     f32     output projection bias
    o_ref    (1, S, D)  f32     output
    ctx_ref  (S, D)     bf16    VMEM scratch: concatenated per-head contexts
    """
    D = num_heads * head_dim

    x = x_ref[0].astype(jnp.bfloat16)                                       # (S, D)

    # Fused Q|K|V projection (scale already folded into the Q columns): f32 MXU accum,
    # f32 bias add, then ONE cast of the whole (S, 3D) slab to bf16.
    qkv = (jnp.dot(x, wqkv_ref[...], preferred_element_type=jnp.float32)
           + bqkv_ref[...]).astype(jnp.bfloat16)                            # (S, 3D)

    mask_add = mask_ref[0].astype(jnp.float32)                              # (S, S)

    for h in range(num_heads):                       # static unroll over heads
        lo = h * head_dim
        qh = qkv[:, lo:lo + head_dim]                                       # (S, Hd) bf16
        kh = qkv[:, D + lo:D + lo + head_dim]                               # (S, Hd) bf16
        vh = qkv[:, 2 * D + lo:2 * D + lo + head_dim]                       # (S, Hd) bf16

        # q @ k^T without materializing a transpose: contract the last dim of both.
        s = lax.dot_general(qh, kh, (((1,), (1,)), ((), ())),
                            preferred_element_type=jnp.float32)             # (S, S) f32
        # Additive mask; equals torch masked_fill after softmax (not bit-identical).
        s = s + mask_add
        s = s - jnp.max(s, axis=-1, keepdims=True)
        p = jnp.exp(s)
        rowsum = jnp.sum(p, axis=-1, keepdims=True)                         # (S, 1)

        # PV on the UNNORMALIZED probs; normalize afterwards on the small (S, Hd)
        # context instead of the (S, S) prob matrix. Reciprocal runs on the EUP slot.
        head = jnp.dot(p.astype(jnp.bfloat16), vh,
                       preferred_element_type=jnp.float32)                  # (S, Hd) f32
        head = head * pl.reciprocal(rowsum, approx=True)
        # TODO(synk): attention-prob dropout skipped (identity in eval / drop_rate=0).

        # Concatenate this head into the VMEM scratch at a static lane offset.
        ctx_ref[:, lo:lo + head_dim] = head.astype(jnp.bfloat16)

    # Single output projection with full contraction depth D (much better MXU
    # utilization on the 256-deep v6e/v7x MXU than H small-K matmuls).
    out = jnp.dot(ctx_ref[...], wfc_ref[...],
                  preferred_element_type=jnp.float32) + bfc_ref[...]        # (S, D) f32
    o_ref[0] = out.astype(o_ref.dtype)


def multi_head_attention(x, mask, params, *, num_heads):
    """x: (B, S, D) f32; mask: (B, 1, S, S) f32 {0,1}; params: (in,out) weights + (1,D) biases."""
    B, S, D = x.shape
    head_dim = D // num_heads
    scale = 1.0 / math.sqrt(head_dim)

    # ---- wrapper-side preprocessing (cheap one-off XLA ops) ----
    # Fused QKV weight, scale folded into Q, bf16 for the MXU; biases stay f32.
    wqkv = jnp.concatenate(
        [params["wq"] * scale, params["wk"], params["wv"]], axis=1).astype(jnp.bfloat16)  # (D, 3D)
    bqkv = jnp.concatenate(
        [params["bq"] * scale, params["bk"], params["bv"]], axis=1).astype(jnp.float32)   # (1, 3D)
    wfc = params["wfc"].astype(jnp.bfloat16)                                              # (D, D)
    bfc = params["bfc"].astype(jnp.float32)                                               # (1, D)
    # Additive mask: 0 where attended, F16_MIN where masked; bf16 halves its HBM traffic.
    mask_add = ((1.0 - mask[:, 0]) * F16_MIN).astype(jnp.bfloat16)                        # (B, S, S)
    # TODO(synk): for padding/causal masks, pass a (B, S) key-validity vector (or build the
    #             mask in-kernel with broadcasted_iota) to cut the S^2 mask HBM traffic (v5e).

    kernel = functools.partial(_mha_kernel, num_heads, head_dim)

    # Explicit VMEM budget: double-buffered per-batch blocks + weights + scratch +
    # in-kernel temporaries (qkv f32/bf16 slabs, (S,S) score/prob tiles), with headroom.
    blk_bytes = (4 * S * D                     # x block (f32)
                 + 2 * S * S                   # mask block (bf16)
                 + 6 * D * D + 12 * D          # wqkv (bf16) + bqkv (f32)
                 + 2 * D * D + 4 * D           # wfc (bf16) + bfc (f32)
                 + 4 * S * D)                  # out block (f32)
    tmp_bytes = 24 * S * D + 16 * S * S + 2 * S * D   # qkv slabs + score/prob + ctx scratch
    vmem_limit = int(min(max(2 * blk_bytes + tmp_bytes + (1 << 20), 32 * 1024 * 1024),
                         64 * 1024 * 1024))

    # NOTE: on v7x the constant-index-map weight blocks (wqkv/bqkv/wfc/bfc) could be
    #       single-buffered (pipeline_mode=pl.Buffered(1)) to halve their resident VMEM.
    # TODO(synk): for S >~ 1K add a query-tile grid axis (grid=(B, S//TQ), flash-style
    #             running max/sum if KV is tiled too) so VMEM is independent of S^2;
    #             BERT4Rec sequence lengths are small, so whole-S blocking is kept here.
    return pl.pallas_call(
        kernel,
        out_shape=jax.ShapeDtypeStruct((B, S, D), x.dtype),
        grid_spec=pltpu.PrefetchScalarGridSpec(
            num_scalar_prefetch=0,
            grid=(B,),
            in_specs=[
                pl.BlockSpec((1, S, D), lambda b: (b, 0, 0)),       # x
                pl.BlockSpec((1, S, S), lambda b: (b, 0, 0)),       # additive mask (bf16)
                pl.BlockSpec((D, 3 * D), lambda b: (0, 0)),         # fused Wqkv (bf16)
                pl.BlockSpec((1, 3 * D), lambda b: (0, 0)),         # fused bqkv (f32)
                pl.BlockSpec((D, D), lambda b: (0, 0)),             # Wfc (bf16)
                pl.BlockSpec((1, D), lambda b: (0, 0)),             # bfc (f32)
            ],
            out_specs=pl.BlockSpec((1, S, D), lambda b: (b, 0, 0)),
            scratch_shapes=[pltpu.VMEM((S, D), jnp.bfloat16)],      # head-concat scratch
        ),
        compiler_params=pltpu.CompilerParams(
            dimension_semantics=("parallel",),
            vmem_limit_bytes=vmem_limit,
        ),
    )(x, mask_add, wqkv, bqkv, wfc, bfc)


def _reference_f32(x, mask, params, *, num_heads):
    """Pure-JAX f32 mirror of the PyTorch forward (exact module semantics)."""
    B, S, D = x.shape
    hd = D // num_heads
    q = x @ params["wq"] + params["bq"]
    k = x @ params["wk"] + params["bk"]
    v = x @ params["wv"] + params["bv"]
    q = q.reshape(B, S, num_heads, hd).transpose(0, 2, 1, 3)
    k = k.reshape(B, S, num_heads, hd).transpose(0, 2, 1, 3)
    v = v.reshape(B, S, num_heads, hd).transpose(0, 2, 1, 3)
    scores = jnp.einsum("bhqd,bhkd->bhqk", q, k) / math.sqrt(hd)
    scores = jnp.where(mask > 0.5, scores, F16_MIN)
    scores = jax.nn.softmax(scores, axis=-1)
    h = jnp.einsum("bhqk,bhkd->bhqd", scores, v).transpose(0, 2, 1, 3).reshape(B, S, D)
    return h @ params["wfc"] + params["bfc"]


def _reference_mixed(x, mask, params, *, num_heads):
    """Reference mirroring the kernel's mixed precision (bf16 MXU inputs, f32 accum/softmax)."""
    B, S, D = x.shape
    hd = D // num_heads
    scale = 1.0 / math.sqrt(hd)
    bf, f32 = jnp.bfloat16, jnp.float32
    xb = x.astype(bf)
    q = jnp.dot(xb, (params["wq"] * scale).astype(bf), preferred_element_type=f32) + params["bq"] * scale
    k = jnp.dot(xb, params["wk"].astype(bf), preferred_element_type=f32) + params["bk"]
    v = jnp.dot(xb, params["wv"].astype(bf), preferred_element_type=f32) + params["bv"]
    q = q.reshape(B, S, num_heads, hd).transpose(0, 2, 1, 3).astype(bf)
    k = k.reshape(B, S, num_heads, hd).transpose(0, 2, 1, 3).astype(bf)
    v = v.reshape(B, S, num_heads, hd).transpose(0, 2, 1, 3).astype(bf)
    s = jnp.einsum("bhqd,bhkd->bhqk", q, k, preferred_element_type=f32)
    s = jnp.where(mask > 0.5, s, F16_MIN)
    p = jax.nn.softmax(s, axis=-1)
    h = jnp.einsum("bhqk,bhkd->bhqd", p.astype(bf), v, preferred_element_type=f32)
    h = h.transpose(0, 2, 1, 3).reshape(B, S, D).astype(bf)
    return jnp.dot(h, params["wfc"].astype(bf), preferred_element_type=f32) + params["bfc"]


if __name__ == "__main__":
    # Small validation shapes (real deployments should use lane-dense D (multiple of 128)
    # and head_dim >= 32 so the MXU / stores run at full width).
    B, S, D, H = 2, 8, 32, 4  # batch, seq, dim, num_heads (head_dim = 8)

    key = jax.random.PRNGKey(0)
    ks = jax.random.split(key, 10)
    init = lambda k, shape, fan_in: jax.random.uniform(
        k, shape, jnp.float32, -1.0 / math.sqrt(fan_in), 1.0 / math.sqrt(fan_in))

    params = {
        "wq": init(ks[0], (D, D), D), "bq": init(ks[1], (1, D), D),
        "wk": init(ks[2], (D, D), D), "bk": init(ks[3], (1, D), D),
        "wv": init(ks[4], (D, D), D), "bv": init(ks[5], (1, D), D),
        "wfc": init(ks[6], (D, D), D), "bfc": init(ks[7], (1, D), D),
    }

    x = jax.random.normal(ks[8], (B, S, D), jnp.float32)
    # Causal-style boolean mask (as float {0,1}), broadcast over heads: (B, 1, S, S).
    causal = jnp.tril(jnp.ones((S, S), jnp.float32))
    mask = jnp.broadcast_to(causal[None, None], (B, 1, S, S))

    out = multi_head_attention(x, mask, params, num_heads=H)
    out = jax.block_until_ready(out)
    assert out.shape == (B, S, D)

    # Tight check against a reference mirroring the kernel's mixed precision (validates logic).
    ref_mixed = _reference_mixed(x, mask, params, num_heads=H)
    assert jnp.allclose(out, ref_mixed, atol=1e-2, rtol=1e-2), "mismatch vs mixed-precision reference"

    # Loose check against the exact f32 PyTorch semantics (difference = bf16 MXU quantization).
    ref_f32 = _reference_f32(x, mask, params, num_heads=H)
    assert jnp.allclose(out, ref_f32, atol=5e-2, rtol=5e-2), "mismatch vs f32 reference"

    print("KERNEL_OK")
</pallas_src>

<mosaic_0001>
module attributes {stable_mosaic.version = 11 : i64} {
  func.func @_mha_kernel(%arg0: i32, %arg1: memref<1x8x32xf32, #tpu.memory_space<vmem>>, %arg2: memref<1x8x8xbf16, #tpu.memory_space<vmem>>, %arg3: memref<32x96xbf16, #tpu.memory_space<vmem>>, %arg4: memref<1x96xf32, #tpu.memory_space<vmem>>, %arg5: memref<32x32xbf16, #tpu.memory_space<vmem>>, %arg6: memref<1x32xf32, #tpu.memory_space<vmem>>, %arg7: memref<1x8x32xf32, #tpu.memory_space<vmem>>, %arg8: memref<8x32xbf16, #tpu.memory_space<vmem>>) attributes {dimension_semantics = [#tpu.dimension_semantics<parallel>], iteration_bounds = array<i64: 2>, scalar_prefetch = 0 : i64, scratch_operands = 1 : i64, tpu.core_type = #tpu.core_type<tc>, window_params = [{transform_indices = @transform_0, window_bounds = array<i64: 1, 8, 32>}, {transform_indices = @transform_1, window_bounds = array<i64: 1, 8, 8>}, {pipeline_mode = #tpu.pipeline_mode<synchronous>, transform_indices = @transform_2, window_bounds = array<i64: 32, 96>}, {pipeline_mode = #tpu.pipeline_mode<synchronous>, transform_indices = @transform_3, window_bounds = array<i64: 1, 96>}, {pipeline_mode = #tpu.pipeline_mode<synchronous>, transform_indices = @transform_4, window_bounds = array<i64: 32, 32>}, {pipeline_mode = #tpu.pipeline_mode<synchronous>, transform_indices = @transform_5, window_bounds = array<i64: 1, 32>}, {transform_indices = @transform_6, window_bounds = array<i64: 1, 8, 32>}]} {
    %c0 = arith.constant 0 : index
    %c0_0 = arith.constant 0 : index
    %c0_1 = arith.constant 0 : index
    %0 = vector.load %arg1[%c0, %c0_0, %c0_1] : memref<1x8x32xf32, #tpu.memory_space<vmem>>, vector<1x8x32xf32>
    %1 = vector.shape_cast %0 : vector<1x8x32xf32> to vector<8x32xf32>
    %2 = arith.truncf %1 : vector<8x32xf32> to vector<8x32xbf16>
    %c0_2 = arith.constant 0 : index
    %c0_3 = arith.constant 0 : index
    %3 = vector.load %arg3[%c0_2, %c0_3] : memref<32x96xbf16, #tpu.memory_space<vmem>>, vector<32x96xbf16>
    %cst = arith.constant dense<0.000000e+00> : vector<8x96xf32>
    %4 = tpu.matmul %2, %3, %cst {dimension_numbers = #tpu.dot_dimension_numbers<[1], [0], [0], [1], [0, 0, 1, 1], [], []>} : vector<8x32xbf16>, vector<32x96xbf16>, vector<8x96xf32> -> vector<8x96xf32>
    %c0_4 = arith.constant 0 : index
    %c0_5 = arith.constant 0 : index
    %5 = vector.load %arg4[%c0_4, %c0_5] : memref<1x96xf32, #tpu.memory_space<vmem>>, vector<1x96xf32>
    %6 = vector.broadcast %5 : vector<1x96xf32> to vector<8x96xf32>
    %7 = arith.addf %4, %6 : vector<8x96xf32>
    %8 = arith.truncf %7 : vector<8x96xf32> to vector<8x96xbf16>
    %c0_6 = arith.constant 0 : index
    %c0_7 = arith.constant 0 : index
    %c0_8 = arith.constant 0 : index
    %9 = vector.load %arg2[%c0_6, %c0_7, %c0_8] : memref<1x8x8xbf16, #tpu.memory_space<vmem>>, vector<1x8x8xbf16>
    %10 = vector.shape_cast %9 : vector<1x8x8xbf16> to vector<8x8xbf16>
    %11 = arith.extf %10 : vector<8x8xbf16> to vector<8x8xf32>
    %12 = vector.extract_strided_slice %8 {offsets = [0, 0], sizes = [8, 8], strides = [1, 1]} : vector<8x96xbf16> to vector<8x8xbf16>
    %13 = vector.extract_strided_slice %8 {offsets = [0, 32], sizes = [8, 8], strides = [1, 1]} : vector<8x96xbf16> to vector<8x8xbf16>
    %14 = vector.extract_strided_slice %8 {offsets = [0, 64], sizes = [8, 8], strides = [1, 1]} : vector<8x96xbf16> to vector<8x8xbf16>
    %cst_9 = arith.constant dense<0.000000e+00> : vector<8x8xf32>
    %15 = tpu.matmul %12, %13, %cst_9 {dimension_numbers = #tpu.dot_dimension_numbers<[1], [1], [0], [0], [0, 0, 1, 0], [], []>} : vector<8x8xbf16>, vector<8x8xbf16>, vector<8x8xf32> -> vector<8x8xf32>
    %16 = arith.addf %15, %11 : vector<8x8xf32>
    %cst_10 = arith.constant dense<0xFF800000> : vector<8xf32>
    %17 = vector.multi_reduction <maximumf>, %16, %cst_10 [1] : vector<8x8xf32> to vector<8xf32>
    %18 = vector.shape_cast %17 : vector<8xf32> to vector<8x1xf32>
    %19 = vector.broadcast %18 : vector<8x1xf32> to vector<8x8xf32>
    %20 = arith.subf %16, %19 : vector<8x8xf32>
    %21 = math.exp %20 : vector<8x8xf32>
    %cst_11 = arith.constant dense<0.000000e+00> : vector<8xf32>
    %22 = vector.multi_reduction <add>, %21, %cst_11 [1] : vector<8x8xf32> to vector<8xf32>
    %23 = vector.shape_cast %22 : vector<8xf32> to vector<8x1xf32>
    %24 = arith.truncf %21 : vector<8x8xf32> to vector<8x8xbf16>
    %cst_12 = arith.constant dense<0.000000e+00> : vector<8x8xf32>
    %25 = tpu.matmul %24, %14, %cst_12 {dimension_numbers = #tpu.dot_dimension_numbers<[1], [0], [0], [1], [0, 0, 1, 1], [], []>} : vector<8x8xbf16>, vector<8x8xbf16>, vector<8x8xf32> -> vector<8x8xf32>
    %26 = tpu.reciprocal %23 {approx = true} : vector<8x1xf32> -> vector<8x1xf32>
    %27 = vector.broadcast %26 : vector<8x1xf32> to vector<8x8xf32>
    %28 = arith.mulf %25, %27 : vector<8x8xf32>
    %29 = arith.truncf %28 : vector<8x8xf32> to vector<8x8xbf16>
    %c0_13 = arith.constant 0 : index
    %c0_14 = arith.constant 0 : index
    %30 = vector.load %arg8[%c0_13, %c0_14] : memref<8x32xbf16, #tpu.memory_space<vmem>>, vector<8x8xbf16>
    tpu.vector_store %arg8[%c0_13, %c0_14], %29 {strides = array<i32>} : memref<8x32xbf16, #tpu.memory_space<vmem>>, vector<8x8xbf16>,
    %31 = vector.extract_strided_slice %8 {offsets = [0, 8], sizes = [8, 8], strides = [1, 1]} : vector<8x96xbf16> to vector<8x8xbf16>
    %32 = vector.extract_strided_slice %8 {offsets = [0, 40], sizes = [8, 8], strides = [1, 1]} : vector<8x96xbf16> to vector<8x8xbf16>
    %33 = vector.extract_strided_slice %8 {offsets = [0, 72], sizes = [8, 8], strides = [1, 1]} : vector<8x96xbf16> to vector<8x8xbf16>
    %cst_15 = arith.constant dense<0.000000e+00> : vector<8x8xf32>
    %34 = tpu.matmul %31, %32, %cst_15 {dimension_numbers = #tpu.dot_dimension_numbers<[1], [1], [0], [0], [0, 0, 1, 0], [], []>} : vector<8x8xbf16>, vector<8x8xbf16>, vector<8x8xf32> -> vector<8x8xf32>
    %35 = arith.addf %34, %11 : vector<8x8xf32>
    %cst_16 = arith.constant dense<0xFF800000> : vector<8xf32>
    %36 = vector.multi_reduction <maximumf>, %35, %cst_16 [1] : vector<8x8xf32> to vector<8xf32>
    %37 = vector.shape_cast %36 : vector<8xf32> to vector<8x1xf32>
    %38 = vector.broadcast %37 : vector<8x1xf32> to vector<8x8xf32>
    %39 = arith.subf %35, %38 : vector<8x8xf32>
    %40 = math.exp %39 : vector<8x8xf32>
    %cst_17 = arith.constant dense<0.000000e+00> : vector<8xf32>
    %41 = vector.multi_reduction <add>, %40, %cst_17 [1] : vector<8x8xf32> to vector<8xf32>
    %42 = vector.shape_cast %41 : vector<8xf32> to vector<8x1xf32>
    %43 = arith.truncf %40 : vector<8x8xf32> to vector<8x8xbf16>
    %cst_18 = arith.constant dense<0.000000e+00> : vector<8x8xf32>
    %44 = tpu.matmul %43, %33, %cst_18 {dimension_numbers = #tpu.dot_dimension_numbers<[1], [0], [0], [1], [0, 0, 1, 1], [], []>} : vector<8x8xbf16>, vector<8x8xbf16>, vector<8x8xf32> -> vector<8x8xf32>
    %45 = tpu.reciprocal %42 {approx = true} : vector<8x1xf32> -> vector<8x1xf32>
    %46 = vector.broadcast %45 : vector<8x1xf32> to vector<8x8xf32>
    %47 = arith.mulf %44, %46 : vector<8x8xf32>
    %48 = arith.truncf %47 : vector<8x8xf32> to vector<8x8xbf16>
    %c0_19 = arith.constant 0 : index
    %c8 = arith.constant 8 : index
    %49 = vector.load %arg8[%c0_19, %c8] : memref<8x32xbf16, #tpu.memory_space<vmem>>, vector<8x8xbf16>
    tpu.vector_store %arg8[%c0_19, %c8], %48 {strides = array<i32>} : memref<8x32xbf16, #tpu.memory_space<vmem>>, vector<8x8xbf16>,
    %50 = vector.extract_strided_slice %8 {offsets = [0, 16], sizes = [8, 8], strides = [1, 1]} : vector<8x96xbf16> to vector<8x8xbf16>
    %51 = vector.extract_strided_slice %8 {offsets = [0, 48], sizes = [8, 8], strides = [1, 1]} : vector<8x96xbf16> to vector<8x8xbf16>
    %52 = vector.extract_strided_slice %8 {offsets = [0, 80], sizes = [8, 8], strides = [1, 1]} : vector<8x96xbf16> to vector<8x8xbf16>
    %cst_20 = arith.constant dense<0.000000e+00> : vector<8x8xf32>
    %53 = tpu.matmul %50, %51, %cst_20 {dimension_numbers = #tpu.dot_dimension_numbers<[1], [1], [0], [0], [0, 0, 1, 0], [], []>} : vector<8x8xbf16>, vector<8x8xbf16>, vector<8x8xf32> -> vector<8x8xf32>
    %54 = arith.addf %53, %11 : vector<8x8xf32>
    %cst_21 = arith.constant dense<0xFF800000> : vector<8xf32>
    %55 = vector.multi_reduction <maximumf>, %54, %cst_21 [1] : vector<8x8xf32> to vector<8xf32>
    %56 = vector.shape_cast %55 : vector<8xf32> to vector<8x1xf32>
    %57 = vector.broadcast %56 : vector<8x1xf32> to vector<8x8xf32>
    %58 = arith.subf %54, %57 : vector<8x8xf32>
    %59 = math.exp %58 : vector<8x8xf32>
    %cst_22 = arith.constant dense<0.000000e+00> : vector<8xf32>
    %60 = vector.multi_reduction <add>, %59, %cst_22 [1] : vector<8x8xf32> to vector<8xf32>
    %61 = vector.shape_cast %60 : vector<8xf32> to vector<8x1xf32>
    %62 = arith.truncf %59 : vector<8x8xf32> to vector<8x8xbf16>
    %cst_23 = arith.constant dense<0.000000e+00> : vector<8x8xf32>
    %63 = tpu.matmul %62, %52, %cst_23 {dimension_numbers = #tpu.dot_dimension_numbers<[1], [0], [0], [1], [0, 0, 1, 1], [], []>} : vector<8x8xbf16>, vector<8x8xbf16>, vector<8x8xf32> -> vector<8x8xf32>
    %64 = tpu.reciprocal %61 {approx = true} : vector<8x1xf32> -> vector<8x1xf32>
    %65 = vector.broadcast %64 : vector<8x1xf32> to vector<8x8xf32>
    %66 = arith.mulf %63, %65 : vector<8x8xf32>
    %67 = arith.truncf %66 : vector<8x8xf32> to vector<8x8xbf16>
    %c0_24 = arith.constant 0 : index
    %c16 = arith.constant 16 : index
    %68 = vector.load %arg8[%c0_24, %c16] : memref<8x32xbf16, #tpu.memory_space<vmem>>, vector<8x8xbf16>
    tpu.vector_store %arg8[%c0_24, %c16], %67 {strides = array<i32>} : memref<8x32xbf16, #tpu.memory_space<vmem>>, vector<8x8xbf16>,
    %69 = vector.extract_strided_slice %8 {offsets = [0, 24], sizes = [8, 8], strides = [1, 1]} : vector<8x96xbf16> to vector<8x8xbf16>
    %70 = vector.extract_strided_slice %8 {offsets = [0, 56], sizes = [8, 8], strides = [1, 1]} : vector<8x96xbf16> to vector<8x8xbf16>
    %71 = vector.extract_strided_slice %8 {offsets = [0, 88], sizes = [8, 8], strides = [1, 1]} : vector<8x96xbf16> to vector<8x8xbf16>
    %cst_25 = arith.constant dense<0.000000e+00> : vector<8x8xf32>
    %72 = tpu.matmul %69, %70, %cst_25 {dimension_numbers = #tpu.dot_dimension_numbers<[1], [1], [0], [0], [0, 0, 1, 0], [], []>} : vector<8x8xbf16>, vector<8x8xbf16>, vector<8x8xf32> -> vector<8x8xf32>
    %73 = arith.addf %72, %11 : vector<8x8xf32>
    %cst_26 = arith.constant dense<0xFF800000> : vector<8xf32>
    %74 = vector.multi_reduction <maximumf>, %73, %cst_26 [1] : vector<8x8xf32> to vector<8xf32>
    %75 = vector.shape_cast %74 : vector<8xf32> to vector<8x1xf32>
    %76 = vector.broadcast %75 : vector<8x1xf32> to vector<8x8xf32>
    %77 = arith.subf %73, %76 : vector<8x8xf32>
    %78 = math.exp %77 : vector<8x8xf32>
    %cst_27 = arith.constant dense<0.000000e+00> : vector<8xf32>
    %79 = vector.multi_reduction <add>, %78, %cst_27 [1] : vector<8x8xf32> to vector<8xf32>
    %80 = vector.shape_cast %79 : vector<8xf32> to vector<8x1xf32>
    %81 = arith.truncf %78 : vector<8x8xf32> to vector<8x8xbf16>
    %cst_28 = arith.constant dense<0.000000e+00> : vector<8x8xf32>
    %82 = tpu.matmul %81, %71, %cst_28 {dimension_numbers = #tpu.dot_dimension_numbers<[1], [0], [0], [1], [0, 0, 1, 1], [], []>} : vector<8x8xbf16>, vector<8x8xbf16>, vector<8x8xf32> -> vector<8x8xf32>
    %83 = tpu.reciprocal %80 {approx = true} : vector<8x1xf32> -> vector<8x1xf32>
    %84 = vector.broadcast %83 : vector<8x1xf32> to vector<8x8xf32>
    %85 = arith.mulf %82, %84 : vector<8x8xf32>
    %86 = arith.truncf %85 : vector<8x8xf32> to vector<8x8xbf16>
    %c0_29 = arith.constant 0 : index
    %c24 = arith.constant 24 : index
    %87 = vector.load %arg8[%c0_29, %c24] : memref<8x32xbf16, #tpu.memory_space<vmem>>, vector<8x8xbf16>
    tpu.vector_store %arg8[%c0_29, %c24], %86 {strides = array<i32>} : memref<8x32xbf16, #tpu.memory_space<vmem>>, vector<8x8xbf16>,
    %c0_30 = arith.constant 0 : index
    %c0_31 = arith.constant 0 : index
    %88 = vector.load %arg8[%c0_30, %c0_31] : memref<8x32xbf16, #tpu.memory_space<vmem>>, vector<8x32xbf16>
    %c0_32 = arith.constant 0 : index
    %c0_33 = arith.constant 0 : index
    %89 = vector.load %arg5[%c0_32, %c0_33] : memref<32x32xbf16, #tpu.memory_space<vmem>>, vector<32x32xbf16>
    %cst_34 = arith.constant dense<0.000000e+00> : vector<8x32xf32>
    %90 = tpu.matmul %88, %89, %cst_34 {dimension_numbers = #tpu.dot_dimension_numbers<[1], [0], [0], [1], [0, 0, 1, 1], [], []>} : vector<8x32xbf16>, vector<32x32xbf16>, vector<8x32xf32> -> vector<8x32xf32>
    %c0_35 = arith.constant 0 : index
    %c0_36 = arith.constant 0 : index
    %91 = vector.load %arg6[%c0_35, %c0_36] : memref<1x32xf32, #tpu.memory_space<vmem>>, vector<1x32xf32>
    %92 = vector.broadcast %91 : vector<1x32xf32> to vector<8x32xf32>
    %93 = arith.addf %90, %92 : vector<8x32xf32>
    %c0_37 = arith.constant 0 : index
    %c0_38 = arith.constant 0 : index
    %c0_39 = arith.constant 0 : index
    %94 = vector.load %arg7[%c0_37, %c0_38, %c0_39] : memref<1x8x32xf32, #tpu.memory_space<vmem>>, vector<1x8x32xf32>
    %95 = vector.shape_cast %94 : vector<1x8x32xf32> to vector<8x32xf32>
    %96 = vector.shape_cast %93 : vector<8x32xf32> to vector<1x8x32xf32>
    tpu.vector_store %arg7[%c0_37, %c0_38, %c0_39], %96 {strides = array<i32>} : memref<1x8x32xf32, #tpu.memory_space<vmem>>, vector<1x8x32xf32>,
    return
  }
  func.func @transform_0(%arg0: i32) -> (i32, i32, i32) {
    %c0_i32 = arith.constant 0 : i32
    %c0_i32_0 = arith.constant 0 : i32
    %c0_i32_1 = arith.constant 0 : i32
    return %arg0, %c0_i32, %c0_i32_0 : i32, i32, i32
  }
  func.func @transform_1(%arg0: i32) -> (i32, i32, i32) {
    %c0_i32 = arith.constant 0 : i32
    %c0_i32_0 = arith.constant 0 : i32
    %c0_i32_1 = arith.constant 0 : i32
    return %arg0, %c0_i32, %c0_i32_0 : i32, i32, i32
  }
  func.func @transform_2(%arg0: i32) -> (i32, i32) {
    %c0_i32 = arith.constant 0 : i32
    %c0_i32_0 = arith.constant 0 : i32
    %c0_i32_1 = arith.constant 0 : i32
    return %c0_i32, %c0_i32_0 : i32, i32
  }
  func.func @transform_3(%arg0: i32) -> (i32, i32) {
    %c0_i32 = arith.constant 0 : i32
    %c0_i32_0 = arith.constant 0 : i32
    %c0_i32_1 = arith.constant 0 : i32
    return %c0_i32, %c0_i32_0 : i32, i32
  }
  func.func @transform_4(%arg0: i32) -> (i32, i32) {
    %c0_i32 = arith.constant 0 : i32
    %c0_i32_0 = arith.constant 0 : i32
    %c0_i32_1 = arith.constant 0 : i32
    return %c0_i32, %c0_i32_0 : i32, i32
  }
  func.func @transform_5(%arg0: i32) -> (i32, i32) {
    %c0_i32 = arith.constant 0 : i32
    %c0_i32_0 = arith.constant 0 : i32
    %c0_i32_1 = arith.constant 0 : i32
    return %c0_i32, %c0_i32_0 : i32, i32
  }
  func.func @transform_6(%arg0: i32) -> (i32, i32, i32) {
    %c0_i32 = arith.constant 0 : i32
    %c0_i32_0 = arith.constant 0 : i32
    %c0_i32_1 = arith.constant 0 : i32
    return %arg0, %c0_i32, %c0_i32_0 : i32, i32, i32
  }
}

</mosaic_0001>

<llo_original>
// kernel: tpu_custom_call.1
$region0: #{tpu_custom_call.1}
  #allocation0 [shape = 'u32[]', space=smem, size = 0x4, offset = 0x4, fixed_abs, tag = 'smem constant byte address 0x4 - core index']
  #allocation1 [shape = 'u32[72,128]{1,0:T(1,128)}', space=vmem, size = 0x9000, scoped, tag = 'internal scratch']
  #allocation2 [shape = 'bf16[8,32]{1,0:T(8,128)(2,1)}', space=vmem, size = 0x800, scoped, tag = 'scratch operand']
  %s0 = inlined_call_operand.hbm [shape: f32[2,8,32], index: 0, kind: input, shape index: {}]
  %s1 = inlined_call_operand.hbm [shape: bf16[2,8,8], index: 1, kind: input, shape index: {}]
  %s2 = inlined_call_operand.hbm [shape: bf16[32,96], index: 2, kind: input, shape index: {}]
  %s3 = inlined_call_operand.vmem [shape: f32[1,96], index: 3, kind: input, shape index: {}]
  %s4 = inlined_call_operand.hbm [shape: bf16[32,32], index: 4, kind: input, shape index: {}]
  %s5 = inlined_call_operand.vmem [shape: f32[1,32], index: 5, kind: input, shape index: {}]
  %s6 = inlined_call_operand.hbm [shape: f32[2,8,32], index: 6, kind: output, shape index: {}]
  %s7 = sld [smem:[#allocation0]]
  $region73: #{tpu_custom_call.1} parent=0
    _
  %s9 = ssub.s32 1, %s7
  %s10 = scalar_select 0, %s9, %s7
  $region1: #{tpu_custom_call.1} parent=0
    #allocation3 [shape = 'u8[8192]{0}', space=vmem, size = 0x2000, scoped, tag = 'input window, operand 0']
    #allocation4 [shape = 's32[2]{0}', space=sflag, size = 0x8, scoped, tag = 'scoped memory for tpu_custom_call.1']
    #allocation5 [shape = 's32[2]{0}', space=sflag, size = 0x8, scoped, tag = 'scoped memory for tpu_custom_call.1']
    #allocation6 [shape = 'u8[4096]{0}', space=vmem, size = 0x1000, scoped, tag = 'input window, operand 1']
    #allocation7 [shape = 's32[2]{0}', space=sflag, size = 0x8, scoped, tag = 'scoped memory for tpu_custom_call.1']
    #allocation8 [shape = 'u8[8192]{0}', space=vmem, size = 0x2000, scoped, tag = 'input window, operand 2, single buffered']
    #allocation9 [shape = 'u8[8192]{0}', space=vmem, size = 0x2000, scoped, tag = 'input window, operand 4, single buffered']
    #allocation10 [shape = 's32[1]{0}', space=sflag, size = 0x4, scoped, tag = 'scoped memory for tpu_custom_call.1']
    #allocation11 [shape = 'u8[8192]{0}', space=vmem, size = 0x2000, scoped, tag = 'output window, operand 0']
    %11 = vsyncpa [#allocation4], 0
    %s12 = scalar_lea.sflag [#allocation4], 1
    %13 = vsyncpa %s12, 0
    %14 = vsyncpa [#allocation7], 0
    %s15 = scalar_lea.sflag [#allocation7], 1
    %16 = vsyncpa %s15, 0
    %17 = vsyncpa [#allocation10], 0
    %18 = vsyncpa [#allocation5], 0
    %s19 = scalar_lea.sflag [#allocation5], 1
    %20 = vsyncpa %s19, 0
    loop: start=0, step=1, limit=4
    $region2: #{tpu_custom_call.1} parent=1 // loop_pre_header
      _
    $region3: #{tpu_custom_call.1} parent=1 // loop_header
      %s22 = sphi 0, %s26
      %p23 = scmp.ge.s32.totalorder %s22, 4
      %s32 = sphi 0, %s34
      %s35 = sphi 0, %s32
      %s36 = sphi 0, %s35
      %s52 = sphi 0, %s36
      %s58 = sphi 0, %s60
      %s61 = sphi 0, %s58
      %s62 = sphi 0, %s61
      %s78 = sphi 0, %s62
      %s82 = sphi 0, %s82
      %s84 = sphi 0, %s82
      %s85 = sphi 0, %s84
      %s99 = sphi 0, %s85
      %s103 = sphi 0, %s103
      %s105 = sphi 0, %s103
      %s106 = sphi 0, %s105
      %s120 = sphi 0, %s106
      %s124 = sphi 0, %s124
      %s126 = sphi 0, %s124
      %s127 = sphi 0, %s126
      %s141 = sphi 0, %s127
      %s145 = sphi 0, %s145
      %s147 = sphi 0, %s145
      %s148 = sphi 0, %s147
      %s162 = sphi 0, %s148
      %s168 = sphi 0, %s170
      %s171 = sphi 0, %s168
      %s172 = sphi 0, %s171
      %s188 = sphi 0, %s172
    $region4: #{tpu_custom_call.1} parent=1 // loop_header_branch
      %25 = sbr.rel (%p23) target = $region8
    $region5: #{tpu_custom_call.1} parent=1 // loop_body
      %s27 = ssub.s32 %s22, 1
      %s28 = ssub.s32 %s22, 2
      %s29 = sadd.s32 %s22, 1
      %s30 = ssub.s32 %s22, %s29
      %p31 = scmp.eq.s32.totalorder %s30, 0
      %s33 = sadd.s32 %s32, 1
      %s34 = scalar_select %p31, %s32, %s33
      %p37 = pneg %p31
      %p38 = scmp.eq.s32.totalorder %s22, 1
      %p39 = por %p37, %p38
      %p40 = scmp.ne.s32.totalorder %s32, %s35
      %p41 = scmp.eq.s32.totalorder %s22, 0
      %p42 = por %p40, %p41
      %p43 = scmp.ne.s32.totalorder %s32, %s35
      %p44 = scmp.eq.s32.totalorder %s27, 1
      %p45 = por %p43, %p44
      %p46 = scmp.ne.s32.totalorder %s35, %s36
      %p47 = scmp.eq.s32.totalorder %s27, 0
      %p48 = por %p46, %p47
      %p49 = scmp.ne.s32.totalorder %s35, %s36
      %p50 = scmp.eq.s32.totalorder %s28, 1
      %p51 = por %p49, %p50
      %p53 = scmp.ne.s32.totalorder %s36, %s52
      %p54 = scmp.eq.s32.totalorder %s28, 0
      %p55 = por %p53, %p54
      %s56 = ssub.s32 %s22, %s29
      %p57 = scmp.eq.s32.totalorder %s56, 0
      %s59 = sadd.s32 %s58, 1
      %s60 = scalar_select %p57, %s58, %s59
      %p63 = pneg %p57
      %p64 = scmp.eq.s32.totalorder %s22, 1
      %p65 = por %p63, %p64
      %p66 = scmp.ne.s32.totalorder %s58, %s61
      %p67 = scmp.eq.s32.totalorder %s22, 0
      %p68 = por %p66, %p67
      %p69 = scmp.ne.s32.totalorder %s58, %s61
      %p70 = scmp.eq.s32.totalorder %s27, 1
      %p71 = por %p69, %p70
      %p72 = scmp.ne.s32.totalorder %s61, %s62
      %p73 = scmp.eq.s32.totalorder %s27, 0
      %p74 = por %p72, %p73
      %p75 = scmp.ne.s32.totalorder %s61, %s62
      %p76 = scmp.eq.s32.totalorder %s28, 1
      %p77 = por %p75, %p76
      %p79 = scmp.ne.s32.totalorder %s62, %s78
      %p80 = scmp.eq.s32.totalorder %s28, 0
      %p81 = por %p79, %p80
      %s83 = sadd.s32 %s82, 1
      %p86 = scmp.eq.s32.totalorder %s22, 1
      %p87 = scmp.ne.s32.totalorder %s82, %s84
      %p88 = scmp.eq.s32.totalorder %s22, 0
      %p89 = por %p87, %p88
      %p90 = scmp.ne.s32.totalorder %s82, %s84
      %p91 = scmp.eq.s32.totalorder %s27, 1
      %p92 = por %p90, %p91
      %p93 = scmp.ne.s32.totalorder %s84, %s85
      %p94 = scmp.eq.s32.totalorder %s27, 0
      %p95 = por %p93, %p94
      %p96 = scmp.ne.s32.totalorder %s84, %s85
      %p97 = scmp.eq.s32.totalorder %s28, 1
      %p98 = por %p96, %p97
      %p100 = scmp.ne.s32.totalorder %s85, %s99
      %p101 = scmp.eq.s32.totalorder %s28, 0
      %p102 = por %p100, %p101
      %s104 = sadd.s32 %s103, 1
      %p107 = scmp.eq.s32.totalorder %s22, 1
      %p108 = scmp.ne.s32.totalorder %s103, %s105
      %p109 = scmp.eq.s32.totalorder %s22, 0
      %p110 = por %p108, %p109
      %p111 = scmp.ne.s32.totalorder %s103, %s105
      %p112 = scmp.eq.s32.totalorder %s27, 1
      %p113 = por %p111, %p112
      %p114 = scmp.ne.s32.totalorder %s105, %s106
      %p115 = scmp.eq.s32.totalorder %s27, 0
      %p116 = por %p114, %p115
      %p117 = scmp.ne.s32.totalorder %s105, %s106
      %p118 = scmp.eq.s32.totalorder %s28, 1
      %p119 = por %p117, %p118
      %p121 = scmp.ne.s32.totalorder %s106, %s120
      %p122 = scmp.eq.s32.totalorder %s28, 0
      %p123 = por %p121, %p122
      %s125 = sadd.s32 %s124, 1
      %p128 = scmp.eq.s32.totalorder %s22, 1
      %p129 = scmp.ne.s32.totalorder %s124, %s126
      %p130 = scmp.eq.s32.totalorder %s22, 0
      %p131 = por %p129, %p130
      %p132 = scmp.ne.s32.totalorder %s124, %s126
      %p133 = scmp.eq.s32.totalorder %s27, 1
      %p134 = por %p132, %p133
      %p135 = scmp.ne.s32.totalorder %s126, %s127
      %p136 = scmp.eq.s32.totalorder %s27, 0
      %p137 = por %p135, %p136
      %p138 = scmp.ne.s32.totalorder %s126, %s127
      %p139 = scmp.eq.s32.totalorder %s28, 1
      %p140 = por %p138, %p139
      %p142 = scmp.ne.s32.totalorder %s127, %s141
      %p143 = scmp.eq.s32.totalorder %s28, 0
      %p144 = por %p142, %p143
      %s146 = sadd.s32 %s145, 1
      %p149 = scmp.eq.s32.totalorder %s22, 1
      %p150 = scmp.ne.s32.totalorder %s145, %s147
      %p151 = scmp.eq.s32.totalorder %s22, 0
      %p152 = por %p150, %p151
      %p153 = scmp.ne.s32.totalorder %s145, %s147
      %p154 = scmp.eq.s32.totalorder %s27, 1
      %p155 = por %p153, %p154
      %p156 = scmp.ne.s32.totalorder %s147, %s148
      %p157 = scmp.eq.s32.totalorder %s27, 0
      %p158 = por %p156, %p157
      %p159 = scmp.ne.s32.totalorder %s147, %s148
      %p160 = scmp.eq.s32.totalorder %s28, 1
      %p161 = por %p159, %p160
      %p163 = scmp.ne.s32.totalorder %s148, %s162
      %p164 = scmp.eq.s32.totalorder %s28, 0
      %p165 = por %p163, %p164
      %s166 = ssub.s32 %s22, %s29
      %p167 = scmp.eq.s32.totalorder %s166, 0
      %s169 = sadd.s32 %s168, 1
      %s170 = scalar_select %p167, %s168, %s169
      %p173 = pneg %p167
      %p174 = scmp.eq.s32.totalorder %s22, 1
      %p175 = por %p173, %p174
      %p176 = scmp.ne.s32.totalorder %s168, %s171
      %p177 = scmp.eq.s32.totalorder %s22, 0
      %p178 = por %p176, %p177
      %p179 = scmp.ne.s32.totalorder %s168, %s171
      %p180 = scmp.eq.s32.totalorder %s27, 1
      %p181 = por %p179, %p180
      %p182 = scmp.ne.s32.totalorder %s171, %s172
      %p183 = scmp.eq.s32.totalorder %s27, 0
      %p184 = por %p182, %p183
      %p185 = scmp.ne.s32.totalorder %s171, %s172
      %p186 = scmp.eq.s32.totalorder %s28, 1
      %p187 = por %p185, %p186
      %p189 = scmp.ne.s32.totalorder %s172, %s188
      %p190 = scmp.eq.s32.totalorder %s28, 0
      %p191 = por %p189, %p190
      %p192 = scmp.le.s32.totalorder 1, %s22
      %p193 = scmp.lt.s32.totalorder %s22, 3
      %p194 = pnand %p192, %p193
      %p195 = pneg %p194
      // Predicated region
      $region9: #{tpu_custom_call.1} parent=5 // pred_check
        _
      $region10: #{tpu_custom_call.1} parent=5 // pred_check_branch
        %197 = sbr.rel (%p194) target = $region12
      $region11: #{tpu_custom_call.1} parent=5 // pred_region
        %s198 = ssub.s32 %s22, 1
        // Predicated region
        $region13: #{tpu_custom_call.1} parent=11 // pred_check
          %p199 = pneg %p95
        $region14: #{tpu_custom_call.1} parent=11 // pred_check_branch
          %201 = sbr.rel (%p199) target = $region16
        $region15: #{tpu_custom_call.1} parent=11 // pred_region
          %203 = vsyncadd [#allocation7], 0
          %s204 = sshll.u32 %s2, 4
          %s205 = int_to_ptr.hbm [resolvable:$true] %s204
          %s206 = sshll.u32 [#allocation8], 4
          %s207 = int_to_ptr.vmem [resolvable:$true] %s206
          %212 = dma.hbm_to_vmem [thread:$0]  %s205, 256, %s207, [#allocation7], 64, 64, 4
        $region16: #{tpu_custom_call.1} parent=11 // pred_fallthru
          _
        // Predicated region
        $region17: #{tpu_custom_call.1} parent=11 // pred_check
          %p213 = pneg %p116
        $region18: #{tpu_custom_call.1} parent=11 // pred_check_branch
          %215 = sbr.rel (%p213) target = $region20
        $region19: #{tpu_custom_call.1} parent=11 // pred_region
          _
        $region20: #{tpu_custom_call.1} parent=11 // pred_fallthru
          _
        // Predicated region
        $region21: #{tpu_custom_call.1} parent=11 // pred_check
          %p216 = pneg %p137
        $region22: #{tpu_custom_call.1} parent=11 // pred_check_branch
          %218 = sbr.rel (%p216) target = $region24
        $region23: #{tpu_custom_call.1} parent=11 // pred_region
          %220 = vsyncadd [#allocation10], 0
          %s221 = sshll.u32 %s4, 4
          %s222 = int_to_ptr.hbm [resolvable:$true] %s221
          %s223 = sshll.u32 [#allocation9], 4
          %s224 = int_to_ptr.vmem [resolvable:$true] %s223
          %229 = dma.hbm_to_vmem [thread:$0]  %s222, 256, %s224, [#allocation10], 64, 64, 4
        $region24: #{tpu_custom_call.1} parent=11 // pred_fallthru
          _
        // Predicated region
        $region25: #{tpu_custom_call.1} parent=11 // pred_check
          %p230 = pneg %p158
        $region26: #{tpu_custom_call.1} parent=11 // pred_check_branch
          %232 = sbr.rel (%p230) target = $region28
        $region27: #{tpu_custom_call.1} parent=11 // pred_region
          _
        $region28: #{tpu_custom_call.1} parent=11 // pred_fallthru
          _
      $region12: #{tpu_custom_call.1} parent=5 // pred_fallthru
        _
      %p233 = scmp.lt.s32.totalorder %s22, 2
      // Predicated region
      $region29: #{tpu_custom_call.1} parent=5 // pred_check
        %p234 = pneg %p233
      $region30: #{tpu_custom_call.1} parent=5 // pred_check_branch
        %236 = sbr.rel (%p234) target = $region32
      $region31: #{tpu_custom_call.1} parent=5 // pred_region
        // Predicated region
        $region33: #{tpu_custom_call.1} parent=31 // pred_check
          %p237 = pneg %p42
        $region34: #{tpu_custom_call.1} parent=31 // pred_check_branch
          %239 = sbr.rel (%p237) target = $region36
        $region35: #{tpu_custom_call.1} parent=31 // pred_region
          %s240 = sand.u32 %s32, 1
          %s241 = scalar_lea.sflag [#allocation4], %s240
          %s242 = sand.u32 %s32, 1
          %s243 = smul.addr %s242, 8
          %s244 = scalar_lea.vmem [#allocation3], %s243
          %246 = vsyncadd %s241, 0
          %s247 = smul.addr %s22, 8
          %s248 = scalar_lea.hbm %s0, %s247
          %s250 = sshll.u32 %s248, 4
          %s251 = int_to_ptr.hbm [resolvable:$true] %s250
          %s252 = sshll.u32 %s244, 4
          %s253 = int_to_ptr.vmem [resolvable:$true] %s252
          %255 = dma.hbm_to_vmem [thread:$0]  %s251, 128, %s253, %s241
        $region36: #{tpu_custom_call.1} parent=31 // pred_fallthru
          _
        // Predicated region
        $region37: #{tpu_custom_call.1} parent=31 // pred_check
          %p256 = pneg %p68
        $region38: #{tpu_custom_call.1} parent=31 // pred_check_branch
          %258 = sbr.rel (%p256) target = $region40
        $region39: #{tpu_custom_call.1} parent=31 // pred_region
          %s259 = sand.u32 %s22, 1
          %s260 = scalar_lea.sflag [#allocation7], %s259
          %s261 = sand.u32 %s58, 1
          %s262 = smul.addr %s261, 4
          %s263 = scalar_lea.vmem [#allocation6], %s262
          %265 = vsyncadd %s260, 0
          %s266 = smul.addr %s22, 4
          %s267 = scalar_lea.hbm %s1, %s266
          %s269 = sshll.u32 %s267, 4
          %s270 = int_to_ptr.hbm [resolvable:$true] %s269
          %s271 = sshll.u32 %s263, 4
          %s272 = int_to_ptr.vmem [resolvable:$true] %s271
          %274 = dma.hbm_to_vmem [thread:$0]  %s270, 64, %s272, %s260
        $region40: #{tpu_custom_call.1} parent=31 // pred_fallthru
          _
      $region32: #{tpu_custom_call.1} parent=5 // pred_fallthru
        _
      %p275 = scmp.le.s32.totalorder 1, %s22
      %p276 = scmp.lt.s32.totalorder %s22, 3
      %p277 = pnand %p275, %p276
      %p278 = pneg %p277
      // Predicated region
      $region41: #{tpu_custom_call.1} parent=5 // pred_check
        _
      $region42: #{tpu_custom_call.1} parent=5 // pred_check_branch
        %280 = sbr.rel (%p277) target = $region44
      $region43: #{tpu_custom_call.1} parent=5 // pred_region
        %s281 = ssub.s32 %s22, 1
        %s282 = sand.u32 %s35, 1
        %s283 = scalar_lea.sflag [#allocation4], %s282
        %s284 = sand.u32 %s35, 1
        %s285 = smul.addr %s284, 8
        %s286 = scalar_lea.vmem [#allocation3], %s285
        // Predicated region
        $region45: #{tpu_custom_call.1} parent=43 // pred_check
          %p287 = pneg %p48
        $region46: #{tpu_custom_call.1} parent=43 // pred_check_branch
          %289 = sbr.rel (%p287) target = $region48
        $region47: #{tpu_custom_call.1} parent=43 // pred_region
          %291 = dma.done %s283, 128
        $region48: #{tpu_custom_call.1} parent=43 // pred_fallthru
          _
        %s292 = sand.u32 %s27, 1
        %s293 = scalar_lea.sflag [#allocation7], %s292
        %s294 = sand.u32 %s61, 1
        %s295 = smul.addr %s294, 4
        %s296 = scalar_lea.vmem [#allocation6], %s295
        // Predicated region
        $region49: #{tpu_custom_call.1} parent=43 // pred_check
          %p297 = pneg %p74
        $region50: #{tpu_custom_call.1} parent=43 // pred_check_branch
          %299 = sbr.rel (%p297) target = $region52
        $region51: #{tpu_custom_call.1} parent=43 // pred_region
          %301 = dma.done %s293, 64
        $region52: #{tpu_custom_call.1} parent=43 // pred_fallthru
          _
        // Predicated region
        $region53: #{tpu_custom_call.1} parent=43 // pred_check
          %p302 = pneg %p95
        $region54: #{tpu_custom_call.1} parent=43 // pred_check_branch
          %304 = sbr.rel (%p302) target = $region56
        $region55: #{tpu_custom_call.1} parent=43 // pred_region
          %306 = dma.done [#allocation7], 256
        $region56: #{tpu_custom_call.1} parent=43 // pred_fallthru
          _
        // Predicated region
        $region57: #{tpu_custom_call.1} parent=43 // pred_check
          %p307 = pneg %p137
        $region58: #{tpu_custom_call.1} parent=43 // pred_check_branch
          %309 = sbr.rel (%p307) target = $region60
        $region59: #{tpu_custom_call.1} parent=43 // pred_region
          %311 = dma.done [#allocation10], 256
        $region60: #{tpu_custom_call.1} parent=43 // pred_fallthru
          _
        %s312 = sand.u32 %s35, 1
        %s313 = scalar_lea.sflag [#allocation4], %s312
        %s314 = sand.u32 %s35, 1
        %s315 = smul.addr %s314, 8
        %s316 = scalar_lea.vmem [#allocation3], %s315
        %p317 = pneg %p48
        %p318 = pneg %p45
        %s319 = sand.u32 %s27, 1
        %s320 = scalar_lea.sflag [#allocation7], %s319
        %s321 = sand.u32 %s61, 1
        %s322 = smul.addr %s321, 4
        %s323 = scalar_lea.vmem [#allocation6], %s322
        %p324 = pneg %p74
        %p325 = pneg %p71
        %p326 = pneg %p95
        %p327 = pneg %p92
        %p328 = pneg %p116
        %p329 = pneg %p113
        %p330 = pneg %p137
        %p331 = pneg %p134
        %p332 = pneg %p158
        %p333 = pneg %p155
        %p334 = pneg %p184
        %p335 = pneg %p181
        %s336 = sand.u32 %s171, 1
        %s337 = scalar_lea.sflag [#allocation5], %s336
        %s338 = sand.u32 %s171, 1
        %s339 = smul.addr %s338, 8
        %s340 = scalar_lea.vmem [#allocation11], %s339
        %v342 = vld [vmem:[%s286] sm:$0xff]
        %v343 = vpack.c.bf16 %v342, %v342
        %v344 = vld [vmem:[#allocation8] sm:$0xf]
        %v345 = vld [vmem:[#allocation8 + $0x4] sm:$0xf]
        %v346 = vld [vmem:[#allocation8 + $0x8] sm:$0xf]
        %v347 = vld [vmem:[#allocation8 + $0xc] sm:$0xf]
        %v348 = vld [vmem:[%s3] sm:$0x1]
        %v350 = vperm.slane %v348, 0
        %v356 = vunpack.c.l.b16 %v344
        %v357 = vunpack.c.l.b16 %v345
        %v358 = vunpack.c.l.b16 %v346
        %v359 = vunpack.c.l.b16 %v347
        %v360 = vpack.c.b16 %v357, %v356
        %v361 = vpack.c.b16 %v359, %v358
        %vm364 = vcmask 261120
        %v366 = vsel %vm364, %v343, 0
        %368 = vmatpush.bf16.msra.mxu0 0
        %369 = vmatpush.bf16.msra.mxu0 0
        %370 = vmatpush.bf16.msra.mxu0 0
        %371 = vmatpush.bf16.msra.mxu0 0
        %372 = vmatpush.bf16.msra.mxu0 0
        %373 = vmatpush.bf16.msra.mxu0 0
        %374 = vmatpush.bf16.msra.mxu0 %v361
        %375 = vmatpush.bf16.msra.mxu0 %v360
        %376 = vmatmul.bf16.gmra.mxu0 %v366
        %v377 = vpop.f32.mrf.mxu0
        %v378 = vadd.f32 %v350, %v377
        %v379 = vpop.f32.mrf.mxu0
        %380 = vdwg.mxu0
        %v381 = vpack.c.bf16 %v378, %v378
        %v382 = vld [vmem:[%s296] sm:$0xf]
        %v383 = vunpack.c.l.bf16 %v382
        %v385 = vunpack.c.l.b16 %v381
        %v386 = vpack.c.b16 %v385, %v385
        %387 = vrot.lane.b32.xlu0 %v386, 96
        %v388 = vpop.permute.xlu0 %387
        %vm389 = vcmask 64512
        %v391 = vsel %vm389, %v381, 0
        %v394 = vsel %vm389, %v388, 0
        %396 = vmatpush.bf16.xpose.msra.mxu0 0
        %397 = vmatpush.bf16.xpose.msra.mxu0 0
        %398 = vmatpush.bf16.xpose.msra.mxu0 0
        %399 = vmatpush.bf16.xpose.msra.mxu0 0
        %400 = vmatpush.bf16.xpose.msra.mxu0 0
        %401 = vmatpush.bf16.xpose.msra.mxu0 0
        %402 = vmatpush.bf16.xpose.msra.mxu0 0
        %403 = vmatpush.bf16.xpose.msra.mxu0 %v394
        %404 = vmatmul.bf16.gmra.mxu0 %v391
        %v405 = vpop.f32.mrf.mxu0
        %v406 = vadd.f32 %v383, %v405
        %v407 = vpop.f32.mrf.mxu0
        %408 = vdwg.mxu0
        %v409 = vsel %vm389, %v406, -inf
        %410 = vmax.xlane.f32.xlu0 %v409
        %v411 = vpop.xlane.xlu0 %410
        %v412 = vsub.f32 %v406, %v411
        %v413 = vmul.f32 %v412, 1.442695
        %v414 = vpow.pop %v413
        %v415 = vsel %vm389, %v414, 0.0
        %416 = vadd.xlane.f32.xlu0 %v415
        %v417 = vpop.xlane.xlu0 %416
        %v418 = vpack.c.bf16 %v414, %v414
        %419 = vrot.lane.b32.xlu0 %v386, 64
        %v420 = vpop.permute.xlu0 %419
        %v422 = vsel %vm389, %v418, 0
        %vm424 = vcmask 1043456
        %v426 = vsel %vm424, %v420, 0
        %428 = vmatpush.bf16.msra.mxu0 0
        %429 = vmatpush.bf16.msra.mxu0 0
        %430 = vmatpush.bf16.msra.mxu0 0
        %431 = vmatpush.bf16.msra.mxu0 0
        %432 = vmatpush.bf16.msra.mxu0 0
        %433 = vmatpush.bf16.msra.mxu0 0
        %434 = vmatpush.bf16.msra.mxu0 0
        %435 = vmatpush.bf16.msra.mxu0 %v426
        %436 = vmatmul.bf16.gmra.mxu0 %v422
        %v437 = vpop.f32.mrf.mxu0
        %v438 = vadd.f32 0.0, %v437
        %v439 = vpop.f32.mrf.mxu0
        %440 = vdwg.mxu0
        %v441 = vrcp.pop %v417
        %v442 = vmul.f32 %v438, %v441
        %v443 = vpack.c.bf16 %v442, %v442
        %vm444 = vcmask 60416
        %445 = vst.msk [vmem:[#allocation2] sm:$0xf] %vm444, %v443
        %446 = vrot.lane.b32.xlu0 %v386, 120
        %v447 = vpop.permute.xlu0 %446
        %448 = vrot.lane.b32.xlu0 %v386, 88
        %v449 = vpop.permute.xlu0 %448
        %v451 = vsel %vm389, %v447, 0
        %v454 = vsel %vm389, %v449, 0
        %456 = vmatpush.bf16.xpose.msra.mxu0 0
        %457 = vmatpush.bf16.xpose.msra.mxu0 0
        %458 = vmatpush.bf16.xpose.msra.mxu0 0
        %459 = vmatpush.bf16.xpose.msra.mxu0 0
        %460 = vmatpush.bf16.xpose.msra.mxu0 0
        %461 = vmatpush.bf16.xpose.msra.mxu0 0
        %462 = vmatpush.bf16.xpose.msra.mxu0 0
        %463 = vmatpush.bf16.xpose.msra.mxu0 %v454
        %464 = vmatmul.bf16.gmra.mxu0 %v451
        %v465 = vpop.f32.mrf.mxu0
        %v466 = vadd.f32 %v383, %v465
        %v467 = vpop.f32.mrf.mxu0
        %468 = vdwg.mxu0
        %v469 = vsel %vm389, %v466, -inf
        %470 = vmax.xlane.f32.xlu0 %v469
        %v471 = vpop.xlane.xlu0 %470
        %v472 = vsub.f32 %v466, %v471
        %v473 = vmul.f32 %v472, 1.442695
        %v474 = vpow.pop %v473
        %v475 = vsel %vm389, %v474, 0.0
        %476 = vadd.xlane.f32.xlu0 %v475
        %v477 = vpop.xlane.xlu0 %476
        %v478 = vpack.c.bf16 %v474, %v474
        %479 = vrot.lane.b32.xlu0 %v386, 56
        %v480 = vpop.permute.xlu0 %479
        %v482 = vsel %vm389, %v478, 0
        %v485 = vsel %vm424, %v480, 0
        %487 = vmatpush.bf16.msra.mxu0 0
        %488 = vmatpush.bf16.msra.mxu0 0
        %489 = vmatpush.bf16.msra.mxu0 0
        %490 = vmatpush.bf16.msra.mxu0 0
        %491 = vmatpush.bf16.msra.mxu0 0
        %492 = vmatpush.bf16.msra.mxu0 0
        %493 = vmatpush.bf16.msra.mxu0 0
        %494 = vmatpush.bf16.msra.mxu0 %v485
        %495 = vmatmul.bf16.gmra.mxu0 %v482
        %v496 = vpop.f32.mrf.mxu0
        %v497 = vadd.f32 0.0, %v496
        %v498 = vpop.f32.mrf.mxu0
        %499 = vdwg.mxu0
        %v500 = vrcp.pop %v477
        %v501 = vmul.f32 %v497, %v500
        %v502 = vpack.c.bf16 %v501, %v501
        %504 = vrot.lane.b32.xlu0 %v502, 8
        %v505 = vpop.permute.xlu0 %504
        %vm507 = vcmask 126016
        %508 = vst.msk [vmem:[#allocation2] sm:$0xf] %vm507, %v505
        %509 = vrot.lane.b32.xlu0 %v386, 112
        %v510 = vpop.permute.xlu0 %509
        %511 = vrot.lane.b32.xlu0 %v386, 80
        %v512 = vpop.permute.xlu0 %511
        %v514 = vsel %vm389, %v510, 0
        %v517 = vsel %vm389, %v512, 0
        %519 = vmatpush.bf16.xpose.msra.mxu0 0
        %520 = vmatpush.bf16.xpose.msra.mxu0 0
        %521 = vmatpush.bf16.xpose.msra.mxu0 0
        %522 = vmatpush.bf16.xpose.msra.mxu0 0
        %523 = vmatpush.bf16.xpose.msra.mxu0 0
        %524 = vmatpush.bf16.xpose.msra.mxu0 0
        %525 = vmatpush.bf16.xpose.msra.mxu0 0
        %526 = vmatpush.bf16.xpose.msra.mxu0 %v517
        %527 = vmatmul.bf16.gmra.mxu0 %v514
        %v528 = vpop.f32.mrf.mxu0
        %v529 = vadd.f32 %v383, %v528
        %v530 = vpop.f32.mrf.mxu0
        %531 = vdwg.mxu0
        %v532 = vsel %vm389, %v529, -inf
        %533 = vmax.xlane.f32.xlu0 %v532
        %v534 = vpop.xlane.xlu0 %533
        %v535 = vsub.f32 %v529, %v534
        %v536 = vmul.f32 %v535, 1.442695
        %v537 = vpow.pop %v536
        %v538 = vsel %vm389, %v537, 0.0
        %539 = vadd.xlane.f32.xlu0 %v538
        %v540 = vpop.xlane.xlu0 %539
        %v541 = vpack.c.bf16 %v537, %v537
        %542 = vrot.lane.b32.xlu0 %v386, 48
        %v543 = vpop.permute.xlu0 %542
        %v545 = vsel %vm389, %v541, 0
        %v548 = vsel %vm424, %v543, 0
        %550 = vmatpush.bf16.msra.mxu0 0
        %551 = vmatpush.bf16.msra.mxu0 0
        %552 = vmatpush.bf16.msra.mxu0 0
        %553 = vmatpush.bf16.msra.mxu0 0
        %554 = vmatpush.bf16.msra.mxu0 0
        %555 = vmatpush.bf16.msra.mxu0 0
        %556 = vmatpush.bf16.msra.mxu0 0
        %557 = vmatpush.bf16.msra.mxu0 %v548
        %558 = vmatmul.bf16.gmra.mxu0 %v545
        %v559 = vpop.f32.mrf.mxu0
        %v560 = vadd.f32 0.0, %v559
        %v561 = vpop.f32.mrf.mxu0
        %562 = vdwg.mxu0
        %v563 = vrcp.pop %v540
        %v564 = vmul.f32 %v560, %v563
        %v565 = vpack.c.bf16 %v564, %v564
        %567 = vrot.lane.b32.xlu0 %v565, 16
        %v568 = vpop.permute.xlu0 %567
        %vm570 = vcmask 191616
        %571 = vst.msk [vmem:[#allocation2] sm:$0xf] %vm570, %v568
        %572 = vrot.lane.b32.xlu0 %v386, 104
        %v573 = vpop.permute.xlu0 %572
        %574 = vrot.lane.b32.xlu0 %v386, 72
        %v575 = vpop.permute.xlu0 %574
        %v577 = vsel %vm389, %v573, 0
        %v580 = vsel %vm389, %v575, 0
        %582 = vmatpush.bf16.xpose.msra.mxu0 0
        %583 = vmatpush.bf16.xpose.msra.mxu0 0
        %584 = vmatpush.bf16.xpose.msra.mxu0 0
        %585 = vmatpush.bf16.xpose.msra.mxu0 0
        %586 = vmatpush.bf16.xpose.msra.mxu0 0
        %587 = vmatpush.bf16.xpose.msra.mxu0 0
        %588 = vmatpush.bf16.xpose.msra.mxu0 0
        %589 = vmatpush.bf16.xpose.msra.mxu0 %v580
        %590 = vmatmul.bf16.gmra.mxu0 %v577
        %v591 = vpop.f32.mrf.mxu0
        %v592 = vadd.f32 %v383, %v591
        %v593 = vpop.f32.mrf.mxu0
        %594 = vdwg.mxu0
        %v595 = vsel %vm389, %v592, -inf
        %596 = vmax.xlane.f32.xlu0 %v595
        %v597 = vpop.xlane.xlu0 %596
        %v598 = vsub.f32 %v592, %v597
        %v599 = vmul.f32 %v598, 1.442695
        %v600 = vpow.pop %v599
        %v601 = vsel %vm389, %v600, 0.0
        %602 = vadd.xlane.f32.xlu0 %v601
        %v603 = vpop.xlane.xlu0 %602
        %v604 = vpack.c.bf16 %v600, %v600
        %605 = vrot.lane.b32.xlu0 %v386, 40
        %v606 = vpop.permute.xlu0 %605
        %v608 = vsel %vm389, %v604, 0
        %v611 = vsel %vm424, %v606, 0
        %613 = vmatpush.bf16.msra.mxu0 0
        %614 = vmatpush.bf16.msra.mxu0 0
        %615 = vmatpush.bf16.msra.mxu0 0
        %616 = vmatpush.bf16.msra.mxu0 0
        %617 = vmatpush.bf16.msra.mxu0 0
        %618 = vmatpush.bf16.msra.mxu0 0
        %619 = vmatpush.bf16.msra.mxu0 0
        %620 = vmatpush.bf16.msra.mxu0 %v611
        %621 = vmatmul.bf16.gmra.mxu0 %v608
        %v622 = vpop.f32.mrf.mxu0
        %v623 = vadd.f32 0.0, %v622
        %v624 = vpop.f32.mrf.mxu0
        %625 = vdwg.mxu0
        %v626 = vrcp.pop %v603
        %v627 = vmul.f32 %v623, %v626
        %v628 = vpack.c.bf16 %v627, %v627
        %630 = vrot.lane.b32.xlu0 %v628, 24
        %v631 = vpop.permute.xlu0 %630
        %vm633 = vcmask 257216
        %634 = vst.msk [vmem:[#allocation2] sm:$0xf] %vm633, %v631
        %v635 = vld [vmem:[#allocation2] sm:$0xf]
        %v636 = vld [vmem:[#allocation9] sm:$0xf]
        %v637 = vld [vmem:[#allocation9 + $0x4] sm:$0xf]
        %v638 = vld [vmem:[#allocation9 + $0x8] sm:$0xf]
        %v639 = vld [vmem:[#allocation9 + $0xc] sm:$0xf]
        %v640 = vld [vmem:[%s5] sm:$0x1]
        %v642 = vperm.slane %v640, 0
        %v648 = vunpack.c.l.b16 %v636
        %v649 = vunpack.c.l.b16 %v637
        %v650 = vunpack.c.l.b16 %v638
        %v651 = vunpack.c.l.b16 %v639
        %v652 = vpack.c.b16 %v649, %v648
        %v653 = vpack.c.b16 %v651, %v650
        %v657 = vsel %vm364, %v635, 0
        %659 = vmatpush.bf16.msra.mxu0 0
        %660 = vmatpush.bf16.msra.mxu0 0
        %661 = vmatpush.bf16.msra.mxu0 0
        %662 = vmatpush.bf16.msra.mxu0 0
        %663 = vmatpush.bf16.msra.mxu0 0
        %664 = vmatpush.bf16.msra.mxu0 0
        %665 = vmatpush.bf16.msra.mxu0 %v653
        %666 = vmatpush.bf16.msra.mxu0 %v652
        %667 = vmatmul.bf16.gmra.mxu0 %v657
        %v668 = vpop.f32.mrf.mxu0
        %v669 = vadd.f32 %v642, %v668
        %v670 = vpop.f32.mrf.mxu0
        %671 = vdwg.mxu0
        %672 = vst.msk [vmem:[%s340] sm:$0xff] %vm364, %v669
        %s673 = sand.u32 %s171, 1
        %s674 = scalar_lea.sflag [#allocation5], %s673
        %s675 = sand.u32 %s171, 1
        %s676 = smul.addr %s675, 8
        %s677 = scalar_lea.vmem [#allocation11], %s676
        // Predicated region
        $region61: #{tpu_custom_call.1} parent=43 // pred_check
          %p678 = pneg %p181
        $region62: #{tpu_custom_call.1} parent=43 // pred_check_branch
          %680 = sbr.rel (%p678) target = $region64
        $region63: #{tpu_custom_call.1} parent=43 // pred_region
          %682 = vsyncadd %s674, 0
          %s683 = smul.addr %s27, 8
          %s684 = scalar_lea.hbm %s6, %s683
          %s686 = sshll.u32 %s677, 4
          %s687 = int_to_ptr.vmem [resolvable:$true] %s686
          %s688 = sshll.u32 %s684, 4
          %s689 = int_to_ptr.hbm [resolvable:$true] %s688
          %691 = dma.vmem_to_hbm [thread:$0]  %s687, 128, %s689, %s674
        $region64: #{tpu_custom_call.1} parent=43 // pred_fallthru
          _
      $region44: #{tpu_custom_call.1} parent=5 // pred_fallthru
        _
      %p692 = scmp.le.s32.totalorder 2, %s22
      // Predicated region
      $region65: #{tpu_custom_call.1} parent=5 // pred_check
        %p693 = pneg %p692
      $region66: #{tpu_custom_call.1} parent=5 // pred_check_branch
        %695 = sbr.rel (%p693) target = $region68
      $region67: #{tpu_custom_call.1} parent=5 // pred_region
        %s696 = ssub.s32 %s22, 2
        // Predicated region
        $region69: #{tpu_custom_call.1} parent=67 // pred_check
          %p697 = pneg %p187
        $region70: #{tpu_custom_call.1} parent=67 // pred_check_branch
          %699 = sbr.rel (%p697) target = $region72
        $region71: #{tpu_custom_call.1} parent=67 // pred_region
          %s700 = sand.u32 %s172, 1
          %s701 = scalar_lea.sflag [#allocation5], %s700
          %s702 = sand.u32 %s172, 1
          %s703 = smul.addr %s702, 8
          %s704 = scalar_lea.vmem [#allocation11], %s703
          %706 = dma.done %s701, 128
        $region72: #{tpu_custom_call.1} parent=67 // pred_fallthru
          _
      $region68: #{tpu_custom_call.1} parent=5 // pred_fallthru
        _
    $region6: #{tpu_custom_call.1} parent=1 // loop_footer
      %s26 = sadd.s32 1, %s22
    $region7: #{tpu_custom_call.1} parent=1 // loop_footer_branch
      %21 = sbr.rel target = $region3
    $region8: #{tpu_custom_call.1} parent=1 // loop_exit
      _
    %707 = vsyncpa [#allocation4], 1
    %s708 = scalar_lea.sflag [#allocation4], 1
    %709 = vsyncpa %s708, 1
    %710 = vsyncpa [#allocation7], 1
    %s711 = scalar_lea.sflag [#allocation7], 1
    %712 = vsyncpa %s711, 1
    %713 = vsyncpa [#allocation10], 1
    %714 = vsyncpa [#allocation5], 1
    %s715 = scalar_lea.sflag [#allocation5], 1
    %716 = vsyncpa %s715, 1

</llo_original>
